<compile_context>
chip_gen: v7x
topology: tpu7x:2x2x1
jax: 0.10.0
libtpu: 0.0.40
codegen_flags: <defaults>
</compile_context>

<pallas_src>
import math
from typing import NamedTuple

import jax
import jax.numpy as jnp
from jax import lax
from jax.experimental import pallas as pl
from jax.experimental.pallas import tpu as pltpu


def _round_up(x: int, m: int) -> int:
    return ((x + m - 1) // m) * m


def _geglu_kernel(x_ref, w_ref, b_ref, o_ref):
    # x_ref: (tm, dim_in)         token tile (resident across the N axis)
    # w_ref: (dim_in, 2*tn)       [value cols | gate cols] for output tile j
    # b_ref: (1, 2*tn)            fused bias (f32)
    # o_ref: (tm, tn)
    tn = o_ref.shape[-1]
    x = x_ref[...]
    y = jnp.dot(x, w_ref[...], preferred_element_type=jnp.float32)
    y = y + b_ref[...]
    h = y[:, :tn]
    g = y[:, tn:]
    # Exact (erf) GeLU, matching torch.nn.functional.gelu default.
    inv_sqrt2 = jnp.float32(1.0 / math.sqrt(2.0))
    gelu_g = 0.5 * g * (1.0 + lax.erf(g * inv_sqrt2))
    o_ref[...] = (h * gelu_g).astype(o_ref.dtype)


class GegluParams(NamedTuple):
    w: jax.Array        # (dim_in, n_tiles * 2 * tn), value/gate interleaved per tile
    b: jax.Array        # (1, n_tiles * 2 * tn), f32
    dim_in: int
    dim_out: int
    tn: int


def prepare_geglu_params(w, b, *, tn=None, compute_dtype=None) -> GegluParams:
    """One-time repack of PyTorch nn.Linear(dim_in, 2*dim_out) params.

    w: (2*dim_out, dim_in)  (PyTorch layout), b: (2*dim_out,)
    """
    two_dim_out, dim_in = w.shape
    dim_out = two_dim_out // 2
    if tn is None:
        tn = min(512, _round_up(dim_out, 128))   # lane-dense output tiles
    dim_out_p = _round_up(dim_out, tn)
    nt = dim_out_p // tn
    pad = dim_out_p - dim_out

    w_x = jnp.transpose(w[:dim_out, :])          # (dim_in, dim_out)
    w_g = jnp.transpose(w[dim_out:, :])          # (dim_in, dim_out)
    if pad:
        w_x = jnp.pad(w_x, ((0, 0), (0, pad)))
        w_g = jnp.pad(w_g, ((0, 0), (0, pad)))
    # Interleave per N-tile: block j = [value tile j (tn cols) | gate tile j (tn cols)]
    w_fused = jnp.stack(
        [w_x.reshape(dim_in, nt, tn), w_g.reshape(dim_in, nt, tn)], axis=2
    ).reshape(dim_in, nt * 2 * tn)
    if compute_dtype is not None:
        w_fused = w_fused.astype(compute_dtype)

    b_x = b[:dim_out]
    b_g = b[dim_out:]
    if pad:
        b_x = jnp.pad(b_x, (0, pad))
        b_g = jnp.pad(b_g, (0, pad))
    b_fused = jnp.stack(
        [b_x.reshape(nt, tn), b_g.reshape(nt, tn)], axis=1
    ).reshape(1, nt * 2 * tn).astype(jnp.float32)

    return GegluParams(w_fused, b_fused, dim_in, dim_out, tn)


def geglu(x, params: GegluParams, *, tm=256):
    """GeGLU forward.  x: (batch, seq, dim_in) -> (batch, seq, dim_out)."""
    batch, seq, dim_in = x.shape
    assert dim_in == params.dim_in
    dim_out, tn = params.dim_out, params.tn
    fused_n = params.w.shape[1]
    nt = fused_n // (2 * tn)

    M = batch * seq
    tm_eff = min(tm, _round_up(M, 16))           # sublane-aligned, big at real M
    M_p = _round_up(M, tm_eff)

    x2d = x.reshape(M, dim_in)
    if M_p != M:
        x2d = jnp.pad(x2d, ((0, M_p - M), (0, 0)))
    if x2d.dtype != params.w.dtype:
        x2d = x2d.astype(params.w.dtype)          # bf16 MXU path if prepared so

    # VMEM budget: double-buffered x / weight / out tiles + bias, with headroom.
    it_in = jnp.dtype(x2d.dtype).itemsize
    it_out = jnp.dtype(x.dtype).itemsize
    vmem_bytes = (
        2 * (tm_eff * dim_in * it_in + dim_in * 2 * tn * it_in + tm_eff * tn * it_out)
        + 2 * 2 * tn * 4
        + (4 << 20)
    )
    vmem_limit = int(min(max(vmem_bytes, 32 << 20), 100 << 20))

    # TODO(synk): add a K (dim_in) grid axis with an f32 accumulator if dim_in
    # grows so large that a (tm, dim_in) + (dim_in, 2*tn) pair no longer fits.
    out2d = pl.pallas_call(
        _geglu_kernel,
        out_shape=jax.ShapeDtypeStruct((M_p, nt * tn), x.dtype),
        grid_spec=pltpu.PrefetchScalarGridSpec(
            num_scalar_prefetch=0,
            grid=(M_p // tm_eff, nt),
            in_specs=[
                pl.BlockSpec((tm_eff, dim_in), lambda i, j: (i, 0)),   # x tile
                pl.BlockSpec((dim_in, 2 * tn), lambda i, j: (0, j)),   # fused W tile
                pl.BlockSpec((1, 2 * tn), lambda i, j: (0, j)),        # fused bias
            ],
            out_specs=pl.BlockSpec((tm_eff, tn), lambda i, j: (i, j)),
        ),
        compiler_params=pltpu.CompilerParams(
            dimension_semantics=("parallel", "parallel"),
            vmem_limit_bytes=vmem_limit,
        ),
    )(x2d, params.w, params.b)

    out2d = out2d[:M, :dim_out]
    return out2d.reshape(batch, seq, dim_out)


def geglu_ref(x, w, b):
    """Pure-JAX reference matching the PyTorch module."""
    y = jnp.einsum("bsi,oi->bso", x, w) + b
    dim_out = w.shape[0] // 2
    val, gate = y[..., :dim_out], y[..., dim_out:]
    return val * jax.nn.gelu(gate, approximate=False)


if __name__ == "__main__":
    batch, seq, dim_in, dim_out = 2, 8, 32, 32

    key = jax.random.PRNGKey(0)
    kx, kw, kb = jax.random.split(key, 3)

    # Deterministic init mimicking nn.Linear's default (uniform +/- 1/sqrt(fan_in)).
    bound = 1.0 / math.sqrt(dim_in)
    w = jax.random.uniform(kw, (2 * dim_out, dim_in), jnp.float32, -bound, bound)
    b = jax.random.uniform(kb, (2 * dim_out,), jnp.float32, -bound, bound)
    x = jax.random.normal(kx, (batch, seq, dim_in), jnp.float32)

    params = prepare_geglu_params(w, b)          # one-time repack (no per-call transpose)
    out = geglu(x, params)
    jax.block_until_ready(out)

    ref = geglu_ref(x, w, b)
    assert out.shape == (batch, seq, dim_out)
    assert jnp.allclose(out, ref, atol=1e-5, rtol=1e-5), "mismatch vs JAX reference"

    print("KERNEL_OK")
</pallas_src>

<mosaic_0001>
module attributes {stable_mosaic.version = 11 : i64} {
  func.func @_geglu_kernel(%arg0: i32, %arg1: i32, %arg2: memref<16x32xf32, #tpu.memory_space<vmem>>, %arg3: memref<32x256xf32, #tpu.memory_space<vmem>>, %arg4: memref<1x256xf32, #tpu.memory_space<vmem>>, %arg5: memref<16x128xf32, #tpu.memory_space<vmem>>) attributes {dimension_semantics = [#tpu.dimension_semantics<parallel>, #tpu.dimension_semantics<parallel>], iteration_bounds = array<i64: 1, 1>, scalar_prefetch = 0 : i64, scratch_operands = 0 : i64, tpu.core_type = #tpu.core_type<tc>, window_params = [{transform_indices = @transform_0, window_bounds = array<i64: 16, 32>}, {transform_indices = @transform_1, window_bounds = array<i64: 32, 256>}, {transform_indices = @transform_2, window_bounds = array<i64: 1, 256>}, {transform_indices = @transform_3, window_bounds = array<i64: 16, 128>}]} {
    %c0 = arith.constant 0 : index
    %c0_0 = arith.constant 0 : index
    %0 = vector.load %arg2[%c0, %c0_0] : memref<16x32xf32, #tpu.memory_space<vmem>>, vector<16x32xf32>
    %c0_1 = arith.constant 0 : index
    %c0_2 = arith.constant 0 : index
    %1 = vector.load %arg3[%c0_1, %c0_2] : memref<32x256xf32, #tpu.memory_space<vmem>>, vector<32x256xf32>
    %cst = arith.constant dense<0.000000e+00> : vector<16x256xf32>
    %2 = tpu.matmul %0, %1, %cst {dimension_numbers = #tpu.dot_dimension_numbers<[1], [0], [0], [1], [0, 0, 1, 1], [], []>} : vector<16x32xf32>, vector<32x256xf32>, vector<16x256xf32> -> vector<16x256xf32>
    %c0_3 = arith.constant 0 : index
    %c0_4 = arith.constant 0 : index
    %3 = vector.load %arg4[%c0_3, %c0_4] : memref<1x256xf32, #tpu.memory_space<vmem>>, vector<1x256xf32>
    %4 = vector.broadcast %3 : vector<1x256xf32> to vector<16x256xf32>
    %5 = arith.addf %2, %4 : vector<16x256xf32>
    %6 = vector.extract_strided_slice %5 {offsets = [0, 0], sizes = [16, 128], strides = [1, 1]} : vector<16x256xf32> to vector<16x128xf32>
    %7 = vector.extract_strided_slice %5 {offsets = [0, 128], sizes = [16, 128], strides = [1, 1]} : vector<16x256xf32> to vector<16x128xf32>
    %cst_5 = arith.constant 5.000000e-01 : f32
    %8 = vector.broadcast %cst_5 : f32 to vector<16x128xf32>
    %9 = arith.mulf %8, %7 : vector<16x128xf32>
    %cst_6 = arith.constant 0.707106769 : f32
    %10 = vector.broadcast %cst_6 : f32 to vector<16x128xf32>
    %11 = arith.mulf %7, %10 : vector<16x128xf32>
    %12 = math.erf %11 : vector<16x128xf32>
    %cst_7 = arith.constant 1.000000e+00 : f32
    %13 = vector.broadcast %cst_7 : f32 to vector<16x128xf32>
    %14 = arith.addf %13, %12 : vector<16x128xf32>
    %15 = arith.mulf %9, %14 : vector<16x128xf32>
    %16 = arith.mulf %6, %15 : vector<16x128xf32>
    %c0_8 = arith.constant 0 : index
    %c0_9 = arith.constant 0 : index
    %17 = vector.load %arg5[%c0_8, %c0_9] : memref<16x128xf32, #tpu.memory_space<vmem>>, vector<16x128xf32>
    tpu.vector_store %arg5[%c0_8, %c0_9], %16 {strides = array<i32>} : memref<16x128xf32, #tpu.memory_space<vmem>>, vector<16x128xf32>,
    return
  }
  func.func @transform_0(%arg0: i32, %arg1: i32) -> (i32, i32) {
    %c0_i32 = arith.constant 0 : i32
    %c0_i32_0 = arith.constant 0 : i32
    return %arg0, %c0_i32 : i32, i32
  }
  func.func @transform_1(%arg0: i32, %arg1: i32) -> (i32, i32) {
    %c0_i32 = arith.constant 0 : i32
    %c0_i32_0 = arith.constant 0 : i32
    return %c0_i32, %arg1 : i32, i32
  }
  func.func @transform_2(%arg0: i32, %arg1: i32) -> (i32, i32) {
    %c0_i32 = arith.constant 0 : i32
    %c0_i32_0 = arith.constant 0 : i32
    return %c0_i32, %arg1 : i32, i32
  }
  func.func @transform_3(%arg0: i32, %arg1: i32) -> (i32, i32) {
    %c0_i32 = arith.constant 0 : i32
    return %arg0, %arg1 : i32, i32
  }
}

</mosaic_0001>

<llo_original>
// kernel: tpu_custom_call.1
$region0: #{tpu_custom_call.1}
  #allocation0 [shape = 'u32[]', space=smem, size = 0x4, offset = 0x4, fixed_abs, tag = 'smem constant byte address 0x4 - core index']
  #allocation1 [shape = 'u32[144,128]{1,0:T(1,128)}', space=vmem, size = 0x12000, scoped, tag = 'internal scratch']
  %s0 = inlined_call_operand.hbm [shape: f32[16,32], index: 0, kind: input, shape index: {}]
  %s1 = inlined_call_operand.hbm [shape: f32[32,256], index: 1, kind: input, shape index: {}]
  %s2 = inlined_call_operand.vmem [shape: f32[1,256], index: 2, kind: input, shape index: {}]
  %s3 = inlined_call_operand.hbm [shape: f32[16,128], index: 3, kind: output, shape index: {}]
  %s4 = sld [smem:[#allocation0]]
  $region30: #{tpu_custom_call.1} parent=0
    _
  %s6 = ssub.s32 1, %s4
  %s7 = scalar_select 0, %s6, %s4
  $region1: #{tpu_custom_call.1} parent=0
    #allocation2 [shape = 'u8[8192]{0}', space=vmem, size = 0x2000, scoped, tag = 'input window, operand 0, single buffered']
    #allocation3 [shape = 's32[1]{0}', space=sflag, size = 0x4, scoped, tag = 'scoped memory for tpu_custom_call.1']
    #allocation4 [shape = 's32[1]{0}', space=sflag, size = 0x4, scoped, tag = 'scoped memory for tpu_custom_call.1']
    #allocation5 [shape = 'u8[32768]{0}', space=vmem, size = 0x8000, scoped, tag = 'input window, operand 1, single buffered']
    #allocation6 [shape = 's32[1]{0}', space=sflag, size = 0x4, scoped, tag = 'scoped memory for tpu_custom_call.1']
    #allocation7 [shape = 'u8[8192]{0}', space=vmem, size = 0x2000, scoped, tag = 'output window, operand 0, single buffered']
    %8 = vsyncpa [#allocation3], 0
    %9 = vsyncpa [#allocation6], 0
    %10 = vsyncpa [#allocation4], 0
    // Predicated region
    $region2: #{tpu_custom_call.1} parent=1 // pred_check
      _
    $region3: #{tpu_custom_call.1} parent=1 // pred_check_branch
      %12 = sbr.rel (0) target = $region5
    $region4: #{tpu_custom_call.1} parent=1 // pred_region
      %s14 = ssub.s32 256, 256
      %15 = vsyncadd [#allocation3], %s14
      %s16 = sshll.u32 [#allocation2], 4
      %s17 = int_to_ptr.vmem [resolvable:$true] %s16
      %22 = dma.hbm_to_vmem [thread:$0]  %s0, 256, %s17, [#allocation3], 128, 128, 8
    $region5: #{tpu_custom_call.1} parent=1 // pred_fallthru
      _
    // Predicated region
    $region6: #{tpu_custom_call.1} parent=1 // pred_check
      _
    $region7: #{tpu_custom_call.1} parent=1 // pred_check_branch
      %24 = sbr.rel (0) target = $region9
    $region8: #{tpu_custom_call.1} parent=1 // pred_region
      %s26 = ssub.s32 1024, 1024
      %27 = vsyncadd [#allocation6], %s26
      %s28 = sshll.u32 [#allocation5], 4
      %s29 = int_to_ptr.vmem [resolvable:$true] %s28
      %34 = dma.hbm_to_vmem [thread:$0]  %s1, 1024, %s29, [#allocation6], 256, 256, 16
    $region9: #{tpu_custom_call.1} parent=1 // pred_fallthru
      _
    // Predicated region
    $region10: #{tpu_custom_call.1} parent=1 // pred_check
      _
    $region11: #{tpu_custom_call.1} parent=1 // pred_check_branch
      %36 = sbr.rel (0) target = $region13
    $region12: #{tpu_custom_call.1} parent=1 // pred_region
      _
    $region13: #{tpu_custom_call.1} parent=1 // pred_fallthru
      _
    // Predicated region
    $region14: #{tpu_custom_call.1} parent=1 // pred_check
      _
    $region15: #{tpu_custom_call.1} parent=1 // pred_check_branch
      %38 = sbr.rel (0) target = $region17
    $region16: #{tpu_custom_call.1} parent=1 // pred_region
      %39 = dma.done [#allocation3], 256
    $region17: #{tpu_custom_call.1} parent=1 // pred_fallthru
      _
    // Predicated region
    $region18: #{tpu_custom_call.1} parent=1 // pred_check
      _
    $region19: #{tpu_custom_call.1} parent=1 // pred_check_branch
      %41 = sbr.rel (0) target = $region21
    $region20: #{tpu_custom_call.1} parent=1 // pred_region
      %42 = dma.done [#allocation6], 1024
    $region21: #{tpu_custom_call.1} parent=1 // pred_fallthru
      _
    %v43 = vld [vmem:[#allocation2] sm:$0xff]
    %v44 = vld [vmem:[#allocation2 + $0x8] sm:$0xff]
    %v45 = vld [vmem:[#allocation5] sm:$0xff]
    %v46 = vld [vmem:[#allocation5 + $0x8] sm:$0xff]
    %v47 = vld [vmem:[#allocation5 + $0x10] sm:$0xff]
    %v48 = vld [vmem:[#allocation5 + $0x18] sm:$0xff]
    %v49 = vld [vmem:[#allocation5 + $0x20] sm:$0xff]
    %v50 = vld [vmem:[#allocation5 + $0x28] sm:$0xff]
    %v51 = vld [vmem:[#allocation5 + $0x30] sm:$0xff]
    %v52 = vld [vmem:[#allocation5 + $0x38] sm:$0xff]
    %v53 = vld [vmem:[%s2] sm:$0x3]
    %v55 = vlaneseq
    %v56 = vshrl.u32 %v55, 7
    %v57 = vsub.s32 0, %v56
    %v58 = vrot.slane %v53, %v57
    %v59 = vlaneseq
    %v60 = vshrl.u32 %v59, 7
    %v61 = vsub.s32 1, %v60
    %v62 = vrot.slane %v53, %v61
    %vm65 = vcmask 261120
    %v67 = vsel %vm65, %v43, 0
    %v70 = vsel %vm65, %v44, 0
    %72 = vmatprep.subr.mxu0 %v46
    %73 = vmatpush1.msra.mxu0 %v45
    %74 = vmatprep.subr.mxu0 %v48
    %75 = vmatpush1.msra.mxu0 %v47
    %76 = vmatprep.subr.mxu0 %v50
    %77 = vmatpush1.msra.mxu0 %v49
    %78 = vmatprep.subr.mxu0 %v52
    %79 = vmatpush1.msra.mxu0 %v51
    %80 = vmatprep.subr.mxu0 0.0
    %81 = vmatpush1.msra.mxu0 0.0
    %82 = vmatprep.subr.mxu0 0.0
    %83 = vmatpush1.msra.mxu0 0.0
    %84 = vmatprep.subr.mxu0 0.0
    %85 = vmatpush1.msra.mxu0 0.0
    %86 = vmatprep.subr.mxu0 0.0
    %87 = vmatpush1.msra.mxu0 0.0
    %88 = vmatprep.subr.mxu0 0.0
    %89 = vmatpush1.msra.mxu0 0.0
    %90 = vmatprep.subr.mxu0 0.0
    %91 = vmatpush1.msra.mxu0 0.0
    %92 = vmatprep.subr.mxu0 0.0
    %93 = vmatpush1.msra.mxu0 0.0
    %94 = vmatprep.subr.mxu0 0.0
    %95 = vmatpush1.msra.mxu0 0.0
    %96 = vmatprep.subr.mxu0 0.0
    %97 = vmatpush1.msra.mxu0 0.0
    %98 = vmatprep.subr.mxu0 0.0
    %99 = vmatpush1.msra.mxu0 0.0
    %100 = vmatprep.subr.mxu0 0.0
    %101 = vmatpush1.msra.mxu0 0.0
    %102 = vmatprep.subr.mxu0 0.0
    %103 = vmatpush1.msra.mxu0 0.0
    %104 = vmatprep.subr.mxu0 0.0
    %105 = vmatpush1.msra.mxu0 0.0
    %106 = vmatprep.subr.mxu0 0.0
    %107 = vmatpush1.msra.mxu0 0.0
    %108 = vmatprep.subr.mxu0 0.0
    %109 = vmatpush1.msra.mxu0 0.0
    %110 = vmatprep.subr.mxu0 0.0
    %111 = vmatpush1.msra.mxu0 0.0
    %112 = vmatprep.subr.mxu0 0.0
    %113 = vmatpush1.msra.mxu0 0.0
    %114 = vmatprep.subr.mxu0 0.0
    %115 = vmatpush1.msra.mxu0 0.0
    %116 = vmatprep.subr.mxu0 0.0
    %117 = vmatpush1.msra.mxu0 0.0
    %118 = vmatprep.subr.mxu0 0.0
    %119 = vmatpush1.msra.mxu0 0.0
    %120 = vmatprep.subr.mxu0 0.0
    %121 = vmatpush1.msra.mxu0 0.0
    %122 = vmatprep.subr.mxu0 0.0
    %123 = vmatpush1.msra.mxu0 0.0
    %124 = vmatprep.subr.mxu0 0.0
    %125 = vmatpush1.msra.mxu0 0.0
    %126 = vmatprep.subr.mxu0 0.0
    %127 = vmatpush1.msra.mxu0 0.0
    %128 = vmatprep.subr.mxu0 0.0
    %129 = vmatpush1.msra.mxu0 0.0
    %130 = vmatprep.subr.mxu0 0.0
    %131 = vmatpush1.msra.mxu0 0.0
    %132 = vmatprep.subr.mxu0 0.0
    %133 = vmatpush1.msra.mxu0 0.0
    %134 = vmatprep.subr.mxu0 0.0
    %135 = vmatpush1.msra.mxu0 0.0
    %136 = vmatprep.mubr.f32.mxu0 0.0
    %137 = vmatmul.mubr.f32.gmra.mrb[0].mxu0 %v67
    %v138 = vpop.f32.mrb[0].mxu0
    %v139 = vadd.f32 %v58, %v138
    %v140 = vpop.f32.mrb[0].mxu0
    %v141 = vadd.f32 %v62, %v140
    %142 = vmatprep.mubr.f32.mxu0 0.0
    %143 = vmatmul.mubr.f32.gmra.mrb[0].mxu0 %v70
    %v144 = vpop.f32.mrb[0].mxu0
    %v145 = vadd.f32 %v58, %v144
    %v146 = vpop.f32.mrb[0].mxu0
    %v147 = vadd.f32 %v62, %v146
    %148 = vdwg.mxu0
    %v149 = vmul.f32 %v141, 0.5
    %v150 = vmul.f32 %v147, 0.5
    %v151 = vmul.f32 %v141, 0.70710677
    %v152 = vmul.f32 %v147, 0.70710677
    %v153 = verf.f32.pop %v151
    %v154 = verf.f32.pop %v152
    %v155 = vadd.f32 %v153, 1.0
    %v156 = vadd.f32 %v154, 1.0
    %v157 = vmul.f32 %v149, %v155
    %v158 = vmul.f32 %v150, %v156
    %v159 = vmul.f32 %v139, %v157
    %v160 = vmul.f32 %v145, %v158
    %161 = vst [vmem:[#allocation7] sm:$0xff] %v159
    %162 = vst [vmem:[#allocation7 + $0x8] sm:$0xff] %v160
    // Predicated region
    $region22: #{tpu_custom_call.1} parent=1 // pred_check
      _
    $region23: #{tpu_custom_call.1} parent=1 // pred_check_branch
      %164 = sbr.rel (0) target = $region25
    $region24: #{tpu_custom_call.1} parent=1 // pred_region
      %s166 = ssub.s32 256, 256
      %167 = vsyncadd [#allocation4], %s166
      %s168 = sshll.u32 [#allocation7], 4
      %s169 = int_to_ptr.vmem [resolvable:$true] %s168
      %174 = dma.vmem_to_hbm [thread:$0]  %s169, 256, %s3, [#allocation4], 128, 128, 8
    $region25: #{tpu_custom_call.1} parent=1 // pred_fallthru
      _
    // Predicated region
    $region26: #{tpu_custom_call.1} parent=1 // pred_check
      _
    $region27: #{tpu_custom_call.1} parent=1 // pred_check_branch
      %176 = sbr.rel (0) target = $region29
    $region28: #{tpu_custom_call.1} parent=1 // pred_region
      %177 = dma.done [#allocation4], 256
    $region29: #{tpu_custom_call.1} parent=1 // pred_fallthru
      _
    %178 = vsyncpa [#allocation3], 1
    %179 = vsyncpa [#allocation6], 1
    %180 = vsyncpa [#allocation4], 1

</llo_original>
